<compile_context>
chip_gen: v6e
topology: v6e:2x2x1
jax: 0.10.0
libtpu: 0.0.40
codegen_flags: <defaults>
</compile_context>

<pallas_src>
import functools
import math

import jax
import jax.numpy as jnp
from jax.experimental import pallas as pl
from jax.experimental.pallas import tpu as pltpu


_VMEM_TILE_BUDGET = 36 * 1024 * 1024   # double-buffered tile budget (v7x-safe)
_VMEM_LIMIT_BYTES = 48 * 1024 * 1024   # scoped VMEM limit (< v7x 64 MiB physical)


def _round_up(x, m):
    return ((x + m - 1) // m) * m


def _choose_block(dim, cap, align):
    """Pick a block size for one dimension.

    Returns (block, padded_dim).  If the whole dim fits under `cap` we use a
    full-extent block (allowed by the (8,128) rule regardless of alignment),
    so small or already-aligned shapes need no padding at all.  Otherwise we
    split into roughly-equal `align`-aligned blocks and pad up to a multiple.
    """
    if dim <= cap:
        return dim, dim
    nblk = pl.cdiv(dim, cap)
    blk = _round_up(pl.cdiv(dim, nblk), align)
    return blk, _round_up(dim, blk)


# ----------------------------- kernel --------------------------------------- #
def _linear_bias_kernel(x_ref, w_ref, b_ref, o_ref, acc_ref, *, mxu_dtype):
    """y = x @ W + b, tiled over (M, N, K) with an f32 VMEM accumulator."""
    k = pl.program_id(2)

    @pl.when(k == 0)
    def _():
        acc_ref[...] = jnp.zeros_like(acc_ref)

    x_t = x_ref[...]
    w_t = w_ref[...]
    if mxu_dtype is not None:           # optional bf16-in / f32-acc MXU path
        x_t = x_t.astype(mxu_dtype)
        w_t = w_t.astype(mxu_dtype)
    acc_ref[...] += jnp.dot(x_t, w_t, preferred_element_type=jnp.float32)

    @pl.when(k == pl.num_programs(2) - 1)
    def _():
        o_ref[...] = (acc_ref[...] + b_ref[...].astype(jnp.float32)).astype(o_ref.dtype)


# ----------------------------- wrapper -------------------------------------- #
def noisy_linear(x, w, b, *, noise_stddev=0.1, training=False, key=None,
                 use_bf16_matmul=False,
                 _tm_cap=512, _tn_cap=512, _tk_cap=2048):
    """Pallas equivalent of NoisyLinear.forward(x, training)."""
    batch, input_size = x.shape
    in_w, output_size = w.shape
    assert in_w == input_size
    assert b.shape == (output_size,)
    dtype = x.dtype
    itemsize = jnp.dtype(dtype).itemsize

    # ---- noise (reference: x_new = x + N(0, sigma), computed once) ----------
    # The activation is tiny compared with W, so the noise add is one cheap
    # XLA op here instead of per-grid-step EUP work in the kernel.  This also
    # makes the drawn noise independent of the tiling and keeps the kernel
    # MXU / HBM-bound.  sigma == 0 (or eval) skips it entirely.
    if training and noise_stddev != 0.0:
        if key is None:
            key = jax.random.PRNGKey(0)
        noise = noise_stddev * jax.random.normal(key, x.shape, dtype=jnp.float32)
        x = (x.astype(jnp.float32) + noise).astype(dtype)

    # ---- tile sizes ----------------------------------------------------------
    # M: decode-like batches are W-bandwidth bound -> one full-M block; large
    # batches use MXU-native 256/512-row blocks.
    if batch <= _tm_cap:
        tm, Mp = batch, batch
    else:
        tm = _round_up(min(_tm_cap, 512), 256)
        Mp = _round_up(batch, tm)
    # N: lane-dense output blocks (multiple of 128, or full extent if small).
    tn, Np = _choose_block(output_size, _tn_cap, 128)
    # K: largest 128-aligned panel that keeps double-buffered tiles in budget.
    fixed = 2 * tm * tn * itemsize + tm * tn * 4 + 2 * tn * itemsize
    per_k = 2 * (tm + tn) * itemsize
    tk_cap = max(128, min(_tk_cap, (_VMEM_TILE_BUDGET - fixed) // per_k))
    tk, Kp = _choose_block(input_size, tk_cap, 128)

    # ---- padding: only when a dimension actually has to be split ------------
    # For aligned / single-block shapes this is a no-op (W and b pass through
    # untouched).  If a deployment repeatedly hits the padded path, pad W/b
    # once at parameter-init time and pass the padded tensors here instead.
    x_p = x if (Mp, Kp) == (batch, input_size) else jnp.pad(
        x, ((0, Mp - batch), (0, Kp - input_size)))
    w_p = w if (Kp, Np) == (input_size, output_size) else jnp.pad(
        w, ((0, Kp - input_size), (0, Np - output_size)))
    b2 = b.reshape(1, output_size)
    b_p = b2 if Np == output_size else jnp.pad(b2, ((0, 0), (0, Np - output_size)))

    grid = (Mp // tm, Np // tn, Kp // tk)
    mxu_dtype = jnp.bfloat16 if (use_bf16_matmul and dtype == jnp.float32) else None
    kernel = functools.partial(_linear_bias_kernel, mxu_dtype=mxu_dtype)

    out_p = pl.pallas_call(
        kernel,
        out_shape=jax.ShapeDtypeStruct((Mp, Np), dtype),
        grid_spec=pltpu.PrefetchScalarGridSpec(
            num_scalar_prefetch=0,
            grid=grid,
            in_specs=[
                pl.BlockSpec((tm, tk), lambda i, j, k: (i, k)),
                pl.BlockSpec((tk, tn), lambda i, j, k: (k, j)),
                pl.BlockSpec((1, tn), lambda i, j, k: (0, j)),
            ],
            out_specs=pl.BlockSpec((tm, tn), lambda i, j, k: (i, j)),
            scratch_shapes=[pltpu.VMEM((tm, tn), jnp.float32)],
        ),
        compiler_params=pltpu.CompilerParams(
            dimension_semantics=("parallel", "parallel", "arbitrary"),
            vmem_limit_bytes=_VMEM_LIMIT_BYTES,
        ),
    )(x_p, w_p, b_p)

    if (Mp, Np) == (batch, output_size):
        return out_p
    return out_p[:batch, :output_size]


def init_noisy_linear_params(key, input_size, output_size, dtype=jnp.float32):
    # nn.init.xavier_uniform_ on an (input_size, output_size) tensor:
    # uniform(-a, a), a = sqrt(6 / (fan_in + fan_out)); bias zeros.
    bound = math.sqrt(6.0 / (input_size + output_size))
    w = jax.random.uniform(
        key, (input_size, output_size), dtype=dtype, minval=-bound, maxval=bound)
    b = jnp.zeros((output_size,), dtype=dtype)
    return w, b


# ------------------------------ demo / test ---------------------------------- #
if __name__ == "__main__":
    key = jax.random.PRNGKey(0)
    k_w, k_x, k_noise, k_w2, k_x2 = jax.random.split(key, 5)

    # Shapes implied by the spec: NoisyLinear(4 -> 32), small batch.
    batch, input_size, output_size = 2, 4, 32
    w, b = init_noisy_linear_params(k_w, input_size, output_size)
    x = jax.random.normal(k_x, (batch, input_size), dtype=jnp.float32)

    # eval path: y = x @ W + b
    y_eval = jax.block_until_ready(noisy_linear(x, w, b, training=False))
    # training path: y = (x + N(0, 0.1)) @ W + b
    y_train = jax.block_until_ready(
        noisy_linear(x, w, b, noise_stddev=0.1, training=True, key=k_noise))
    # training with sigma=0 must match eval exactly
    y_train0 = jax.block_until_ready(
        noisy_linear(x, w, b, noise_stddev=0.0, training=True, key=k_noise))

    ref_eval = x @ w + b
    noise_ref = 0.1 * jax.random.normal(k_noise, x.shape, dtype=jnp.float32)
    ref_train = (x + noise_ref) @ w + b

    assert y_eval.shape == (batch, output_size)
    assert y_train.shape == (batch, output_size)
    assert jnp.allclose(y_eval, ref_eval, atol=1e-5, rtol=1e-5), "eval mismatch"
    assert jnp.allclose(y_train, ref_train, atol=1e-5, rtol=1e-5), "train mismatch"
    assert jnp.allclose(y_train0, ref_eval, atol=1e-5, rtol=1e-5), "train(sigma=0) mismatch"

    # Second config exercising the multi-block grid + K/N padding path.
    b2_, i2, o2 = 5, 300, 200
    w2, bias2 = init_noisy_linear_params(k_w2, i2, o2)
    x2 = jax.random.normal(k_x2, (b2_, i2), dtype=jnp.float32)
    y2 = jax.block_until_ready(
        noisy_linear(x2, w2, bias2, training=False, _tn_cap=128, _tk_cap=128))
    assert y2.shape == (b2_, o2)
    assert jnp.allclose(y2, x2 @ w2 + bias2, atol=1e-4, rtol=1e-4), "tiled mismatch"

    print("KERNEL_OK")
</pallas_src>

<mosaic_0001>
module attributes {stable_mosaic.version = 11 : i64} {
  func.func @_linear_bias_kernel(%arg0: i32, %arg1: i32, %arg2: i32, %arg3: memref<2x4xf32, #tpu.memory_space<vmem>>, %arg4: memref<4x32xf32, #tpu.memory_space<vmem>>, %arg5: memref<1x32xf32, #tpu.memory_space<vmem>>, %arg6: memref<2x32xf32, #tpu.memory_space<vmem>>, %arg7: memref<2x32xf32, #tpu.memory_space<vmem>>) attributes {dimension_semantics = [#tpu.dimension_semantics<parallel>, #tpu.dimension_semantics<parallel>, #tpu.dimension_semantics<arbitrary>], iteration_bounds = array<i64: 1, 1, 1>, scalar_prefetch = 0 : i64, scratch_operands = 1 : i64, tpu.core_type = #tpu.core_type<tc>, window_params = [{transform_indices = @transform_0, window_bounds = array<i64: 2, 4>}, {transform_indices = @transform_1, window_bounds = array<i64: 4, 32>}, {transform_indices = @transform_2, window_bounds = array<i64: 1, 32>}, {transform_indices = @transform_3, window_bounds = array<i64: 2, 32>}]} {
    %c0_i32 = arith.constant 0 : i32
    %0 = arith.cmpi eq, %arg2, %c0_i32 : i32
    %1 = arith.extui %0 : i1 to i32
    %c0_i32_0 = arith.constant 0 : i32
    %2 = arith.cmpi ne, %1, %c0_i32_0 : i32
    scf.if %2 {
      %cst_10 = arith.constant 0.000000e+00 : f32
      %12 = vector.broadcast %cst_10 : f32 to vector<2x32xf32>
      %c0_11 = arith.constant 0 : index
      %c0_12 = arith.constant 0 : index
      %13 = vector.load %arg7[%c0_11, %c0_12] : memref<2x32xf32, #tpu.memory_space<vmem>>, vector<2x32xf32>
      tpu.vector_store %arg7[%c0_11, %c0_12], %12 {strides = array<i32>} : memref<2x32xf32, #tpu.memory_space<vmem>>, vector<2x32xf32>,
    } else {
    }
    %c0 = arith.constant 0 : index
    %c0_1 = arith.constant 0 : index
    %3 = vector.load %arg3[%c0, %c0_1] : memref<2x4xf32, #tpu.memory_space<vmem>>, vector<2x4xf32>
    %c0_2 = arith.constant 0 : index
    %c0_3 = arith.constant 0 : index
    %4 = vector.load %arg4[%c0_2, %c0_3] : memref<4x32xf32, #tpu.memory_space<vmem>>, vector<4x32xf32>
    %c0_4 = arith.constant 0 : index
    %c0_5 = arith.constant 0 : index
    %5 = vector.load %arg7[%c0_4, %c0_5] : memref<2x32xf32, #tpu.memory_space<vmem>>, vector<2x32xf32>
    %cst = arith.constant dense<0.000000e+00> : vector<2x32xf32>
    %6 = tpu.matmul %3, %4, %cst {dimension_numbers = #tpu.dot_dimension_numbers<[1], [0], [0], [1], [0, 0, 1, 1], [], []>} : vector<2x4xf32>, vector<4x32xf32>, vector<2x32xf32> -> vector<2x32xf32>
    %7 = arith.addf %5, %6 : vector<2x32xf32>
    %c0_6 = arith.constant 0 : index
    %c0_7 = arith.constant 0 : index
    %8 = vector.load %arg7[%c0_6, %c0_7] : memref<2x32xf32, #tpu.memory_space<vmem>>, vector<2x32xf32>
    tpu.vector_store %arg7[%c0_6, %c0_7], %7 {strides = array<i32>} : memref<2x32xf32, #tpu.memory_space<vmem>>, vector<2x32xf32>,
    %c0_i32_8 = arith.constant 0 : i32
    %9 = arith.cmpi eq, %arg2, %c0_i32_8 : i32
    %10 = arith.extui %9 : i1 to i32
    %c0_i32_9 = arith.constant 0 : i32
    %11 = arith.cmpi ne, %10, %c0_i32_9 : i32
    scf.if %11 {
      %c0_10 = arith.constant 0 : index
      %c0_11 = arith.constant 0 : index
      %12 = vector.load %arg7[%c0_10, %c0_11] : memref<2x32xf32, #tpu.memory_space<vmem>>, vector<2x32xf32>
      %c0_12 = arith.constant 0 : index
      %c0_13 = arith.constant 0 : index
      %13 = vector.load %arg5[%c0_12, %c0_13] : memref<1x32xf32, #tpu.memory_space<vmem>>, vector<1x32xf32>
      %14 = vector.broadcast %13 : vector<1x32xf32> to vector<2x32xf32>
      %15 = arith.addf %12, %14 : vector<2x32xf32>
      %c0_14 = arith.constant 0 : index
      %c0_15 = arith.constant 0 : index
      %16 = vector.load %arg6[%c0_14, %c0_15] : memref<2x32xf32, #tpu.memory_space<vmem>>, vector<2x32xf32>
      tpu.vector_store %arg6[%c0_14, %c0_15], %15 {strides = array<i32>} : memref<2x32xf32, #tpu.memory_space<vmem>>, vector<2x32xf32>,
    } else {
    }
    return
  }
  func.func @transform_0(%arg0: i32, %arg1: i32, %arg2: i32) -> (i32, i32) {
    %c0_i32 = arith.constant 0 : i32
    return %arg0, %arg2 : i32, i32
  }
  func.func @transform_1(%arg0: i32, %arg1: i32, %arg2: i32) -> (i32, i32) {
    %c0_i32 = arith.constant 0 : i32
    return %arg2, %arg1 : i32, i32
  }
  func.func @transform_2(%arg0: i32, %arg1: i32, %arg2: i32) -> (i32, i32) {
    %c0_i32 = arith.constant 0 : i32
    %c0_i32_0 = arith.constant 0 : i32
    return %c0_i32, %arg1 : i32, i32
  }
  func.func @transform_3(%arg0: i32, %arg1: i32, %arg2: i32) -> (i32, i32) {
    %c0_i32 = arith.constant 0 : i32
    return %arg0, %arg1 : i32, i32
  }
}

</mosaic_0001>

<llo_original>
// kernel: tpu_custom_call.1
$region0: #{tpu_custom_call.1}
  #allocation0 [shape = 'u32[]', space=smem, size = 0x4, offset = 0x4, fixed_abs, tag = 'smem constant byte address 0x4 - core index']
  #allocation1 [shape = 'u32[144,128]{1,0:T(1,128)}', space=vmem, size = 0x12000, scoped, tag = 'internal scratch']
  #allocation2 [shape = 'f32[2,32]{1,0:T(2,128)}', space=vmem, size = 0x400, scoped, tag = 'scratch operand']
  %s0 = inlined_call_operand.hbm [shape: f32[2,4], index: 0, kind: input, shape index: {}]
  %s1 = inlined_call_operand.hbm [shape: f32[4,32], index: 1, kind: input, shape index: {}]
  %s2 = inlined_call_operand.vmem [shape: f32[1,32], index: 2, kind: input, shape index: {}]
  %s3 = inlined_call_operand.hbm [shape: f32[2,32], index: 3, kind: output, shape index: {}]
  %s4 = sld [smem:[#allocation0]]
  $region38: #{tpu_custom_call.1} parent=0
    _
  %s6 = ssub.s32 1, %s4
  %s7 = scalar_select 0, %s6, %s4
  $region1: #{tpu_custom_call.1} parent=0
    #allocation3 [shape = 'u8[1024]{0}', space=vmem, size = 0x400, scoped, tag = 'input window, operand 0, single buffered']
    #allocation4 [shape = 's32[1]{0}', space=sflag, size = 0x4, scoped, tag = 'scoped memory for tpu_custom_call.1']
    #allocation5 [shape = 's32[1]{0}', space=sflag, size = 0x4, scoped, tag = 'scoped memory for tpu_custom_call.1']
    #allocation6 [shape = 'u8[2048]{0}', space=vmem, size = 0x800, scoped, tag = 'input window, operand 1, single buffered']
    #allocation7 [shape = 's32[1]{0}', space=sflag, size = 0x4, scoped, tag = 'scoped memory for tpu_custom_call.1']
    #allocation8 [shape = 'u8[1024]{0}', space=vmem, size = 0x400, scoped, tag = 'output window, operand 0, single buffered']
    %8 = vsyncpa [#allocation4], 0
    %9 = vsyncpa [#allocation7], 0
    %10 = vsyncpa [#allocation5], 0
    // Predicated region
    $region2: #{tpu_custom_call.1} parent=1 // pred_check
      _
    $region3: #{tpu_custom_call.1} parent=1 // pred_check_branch
      %12 = sbr.rel (0) target = $region5
    $region4: #{tpu_custom_call.1} parent=1 // pred_region
      %s14 = ssub.s32 32, 32
      %15 = vsyncadd [#allocation4], %s14
      %s17 = sshll.u32 [#allocation3], 4
      %s18 = int_to_ptr.vmem [resolvable:$true] %s17
      %20 = dma.hbm_to_vmem [thread:$0]  %s0, 32, %s18, [#allocation4]
    $region5: #{tpu_custom_call.1} parent=1 // pred_fallthru
      _
    // Predicated region
    $region6: #{tpu_custom_call.1} parent=1 // pred_check
      _
    $region7: #{tpu_custom_call.1} parent=1 // pred_check_branch
      %22 = sbr.rel (0) target = $region9
    $region8: #{tpu_custom_call.1} parent=1 // pred_region
      %s24 = ssub.s32 64, 64
      %25 = vsyncadd [#allocation7], %s24
      %s27 = sshll.u32 [#allocation6], 4
      %s28 = int_to_ptr.vmem [resolvable:$true] %s27
      %30 = dma.hbm_to_vmem [thread:$0]  %s1, 64, %s28, [#allocation7]
    $region9: #{tpu_custom_call.1} parent=1 // pred_fallthru
      _
    // Predicated region
    $region10: #{tpu_custom_call.1} parent=1 // pred_check
      _
    $region11: #{tpu_custom_call.1} parent=1 // pred_check_branch
      %32 = sbr.rel (0) target = $region13
    $region12: #{tpu_custom_call.1} parent=1 // pred_region
      _
    $region13: #{tpu_custom_call.1} parent=1 // pred_fallthru
      _
    // Predicated region
    $region14: #{tpu_custom_call.1} parent=1 // pred_check
      _
    $region15: #{tpu_custom_call.1} parent=1 // pred_check_branch
      %34 = sbr.rel (0) target = $region17
    $region16: #{tpu_custom_call.1} parent=1 // pred_region
      %35 = dma.done [#allocation4], 32
    $region17: #{tpu_custom_call.1} parent=1 // pred_fallthru
      _
    // Predicated region
    $region18: #{tpu_custom_call.1} parent=1 // pred_check
      _
    $region19: #{tpu_custom_call.1} parent=1 // pred_check_branch
      %37 = sbr.rel (0) target = $region21
    $region20: #{tpu_custom_call.1} parent=1 // pred_region
      %38 = dma.done [#allocation7], 64
    $region21: #{tpu_custom_call.1} parent=1 // pred_fallthru
      _
    %p39 = scmp.eq.s32.totalorder 0, 0
    // Predicated region
    $region22: #{tpu_custom_call.1} parent=1 // pred_check
      %p40 = pneg %p39
    $region23: #{tpu_custom_call.1} parent=1 // pred_check_branch
      %42 = sbr.rel (%p40) target = $region25
    $region24: #{tpu_custom_call.1} parent=1 // pred_region
      %vm43 = vcmask 254976
      %44 = vst.msk [vmem:[#allocation2] sm:$0x3] %vm43, 0.0
    $region25: #{tpu_custom_call.1} parent=1 // pred_fallthru
      _
    %v45 = vld [vmem:[#allocation3] sm:$0x3]
    %v46 = vld [vmem:[#allocation6] sm:$0xf]
    %v47 = vld [vmem:[#allocation2] sm:$0x3]
    %vm48 = vcmask 31744
    %v50 = vsel %vm48, %v45, 0
    %vm52 = vcmask 1043456
    %v54 = vsel %vm52, %v46, 0
    %56 = vmatprep.subr.mxu0 0.0
    %57 = vmatpush1.msra.mxu0 0.0
    %58 = vmatprep.subr.mxu0 0.0
    %59 = vmatpush1.msra.mxu0 0.0
    %60 = vmatprep.subr.mxu0 0.0
    %61 = vmatpush1.msra.mxu0 0.0
    %62 = vmatprep.subr.mxu0 0.0
    %63 = vmatpush1.msra.mxu0 0.0
    %64 = vmatprep.subr.mxu0 0.0
    %65 = vmatpush1.msra.mxu0 0.0
    %66 = vmatprep.subr.mxu0 0.0
    %67 = vmatpush1.msra.mxu0 0.0
    %68 = vmatprep.subr.mxu0 0.0
    %69 = vmatpush1.msra.mxu0 0.0
    %70 = vmatprep.subr.mxu0 0.0
    %71 = vmatpush1.msra.mxu0 0.0
    %72 = vmatprep.subr.mxu0 0.0
    %73 = vmatpush1.msra.mxu0 0.0
    %74 = vmatprep.subr.mxu0 0.0
    %75 = vmatpush1.msra.mxu0 0.0
    %76 = vmatprep.subr.mxu0 0.0
    %77 = vmatpush1.msra.mxu0 0.0
    %78 = vmatprep.subr.mxu0 0.0
    %79 = vmatpush1.msra.mxu0 0.0
    %80 = vmatprep.subr.mxu0 0.0
    %81 = vmatpush1.msra.mxu0 0.0
    %82 = vmatprep.subr.mxu0 0.0
    %83 = vmatpush1.msra.mxu0 0.0
    %84 = vmatprep.subr.mxu0 0.0
    %85 = vmatpush1.msra.mxu0 0.0
    %86 = vmatprep.subr.mxu0 0.0
    %87 = vmatpush1.msra.mxu0 %v54
    %88 = vmatprep.subr.mxu0 0.0
    %89 = vmatpush2.msra.mxu0 0.0
    %90 = vmatprep.subr.mxu0 0.0
    %91 = vmatpush2.msra.mxu0 0.0
    %92 = vmatprep.subr.mxu0 0.0
    %93 = vmatpush2.msra.mxu0 0.0
    %94 = vmatprep.subr.mxu0 0.0
    %95 = vmatpush2.msra.mxu0 0.0
    %96 = vmatprep.subr.mxu0 0.0
    %97 = vmatpush2.msra.mxu0 0.0
    %98 = vmatprep.subr.mxu0 0.0
    %99 = vmatpush2.msra.mxu0 0.0
    %100 = vmatprep.subr.mxu0 0.0
    %101 = vmatpush2.msra.mxu0 0.0
    %102 = vmatprep.subr.mxu0 0.0
    %103 = vmatpush2.msra.mxu0 0.0
    %104 = vmatprep.subr.mxu0 0.0
    %105 = vmatpush2.msra.mxu0 0.0
    %106 = vmatprep.subr.mxu0 0.0
    %107 = vmatpush2.msra.mxu0 0.0
    %108 = vmatprep.subr.mxu0 0.0
    %109 = vmatpush2.msra.mxu0 0.0
    %110 = vmatprep.subr.mxu0 0.0
    %111 = vmatpush2.msra.mxu0 0.0
    %112 = vmatprep.subr.mxu0 0.0
    %113 = vmatpush2.msra.mxu0 0.0
    %114 = vmatprep.subr.mxu0 0.0
    %115 = vmatpush2.msra.mxu0 0.0
    %116 = vmatprep.subr.mxu0 0.0
    %117 = vmatpush2.msra.mxu0 0.0
    %118 = vmatprep.subr.mxu0 0.0
    %119 = vmatpush2.msra.mxu0 0.0
    %120 = vmatprep.mubr.f32.mxu0 0.0
    %121 = vmatmul.mubr.f32.gmra.mxu0 %v50
    %v122 = vpop.f32.mrf.mxu0
    %v123 = vadd.f32 0.0, %v122
    %v124 = vpop.f32.mrf.mxu0
    %125 = vdwg.mxu0
    %v126 = vadd.f32 %v47, %v123
    %vm127 = vcmask 254976
    %128 = vst.msk [vmem:[#allocation2] sm:$0x3] %vm127, %v126
    // Predicated region
    $region26: #{tpu_custom_call.1} parent=1 // pred_check
      %p129 = pneg %p39
    $region27: #{tpu_custom_call.1} parent=1 // pred_check_branch
      %131 = sbr.rel (%p129) target = $region29
    $region28: #{tpu_custom_call.1} parent=1 // pred_region
      %v132 = vld [vmem:[#allocation2] sm:$0x3]
      %v133 = vld [vmem:[%s2] sm:$0x1]
      %v135 = vlaneseq
      %v136 = vshrl.u32 %v135, 7
      %v137 = vsub.s32 0, %v136
      %v138 = vrot.slane %v133, %v137
      %v140 = vadd.f32 %v132, %v138
      %141 = vst.msk [vmem:[#allocation8] sm:$0x3] %vm127, %v140
    $region29: #{tpu_custom_call.1} parent=1 // pred_fallthru
      _
    // Predicated region
    $region30: #{tpu_custom_call.1} parent=1 // pred_check
      _
    $region31: #{tpu_custom_call.1} parent=1 // pred_check_branch
      %143 = sbr.rel (0) target = $region33
    $region32: #{tpu_custom_call.1} parent=1 // pred_region
      %s145 = ssub.s32 32, 32
      %146 = vsyncadd [#allocation5], %s145
      %s148 = sshll.u32 [#allocation8], 4
      %s149 = int_to_ptr.vmem [resolvable:$true] %s148
      %151 = dma.vmem_to_hbm [thread:$0]  %s149, 32, %s3, [#allocation5]
    $region33: #{tpu_custom_call.1} parent=1 // pred_fallthru
      _
    // Predicated region
    $region34: #{tpu_custom_call.1} parent=1 // pred_check
      _
    $region35: #{tpu_custom_call.1} parent=1 // pred_check_branch
      %153 = sbr.rel (0) target = $region37
    $region36: #{tpu_custom_call.1} parent=1 // pred_region
      %154 = dma.done [#allocation5], 32
    $region37: #{tpu_custom_call.1} parent=1 // pred_fallthru
      _
    %155 = vsyncpa [#allocation4], 1
    %156 = vsyncpa [#allocation7], 1
    %157 = vsyncpa [#allocation5], 1

</llo_original>
